<compile_context>
chip_gen: v7x
topology: tpu7x:2x2x1
jax: 0.10.0
libtpu: 0.0.40
codegen_flags: <defaults>
</compile_context>

<pallas_src>
import jax
import jax.numpy as jnp
from jax.experimental import pallas as pl
from jax.experimental.pallas import tpu as pltpu


_MIB = 1024 * 1024


def _round_up(n, m):
    return ((n + m - 1) // m) * m


def _round_down(n, m):
    return (n // m) * m


def _tpu_generation():
    """Returns (default_scoped_vmem_bytes, safe_vmem_cap_bytes, tensorcores_per_chip)."""
    try:
        kind = jax.devices()[0].device_kind.lower()
    except Exception:
        kind = ""
    if "v7" in kind or "tpu7" in kind:
        return 32 * _MIB, 44 * _MIB, 2       # 64 MiB physical per TC -> leave headroom
    if "v6" in kind or "trillium" in kind:
        return 32 * _MIB, 100 * _MIB, 1      # 128 MiB physical
    if "v5p" in kind:
        return 16 * _MIB, 100 * _MIB, 2
    if "v5e" in kind or "v5 lite" in kind or "v5lite" in kind:
        return 16 * _MIB, 100 * _MIB, 1
    if "v5" in kind:
        return 16 * _MIB, 100 * _MIB, 2
    if "v4" in kind:
        return 16 * _MIB, 100 * _MIB, 2
    # Unknown / older chips: conservative.
    return 16 * _MIB, 16 * _MIB, 1


def _chunk_rows(D):
    """Rows reduced per inner step (multiple of 128 -> lane-aligned output stores).

    Chosen so the (chunk, round_up(D,128)) product/broadcast temporaries stay small.
    """
    lane_d = _round_up(D, 128)
    if lane_d <= 256:
        return 512
    if lane_d <= 512:
        return 256
    return 128


def _vmem_need_bytes(tb, D, dtype):
    """Estimated scoped-VMEM footprint: double-buffered x tile + output slab + temps."""
    itemsize = jnp.dtype(dtype).itemsize
    lane_d = _round_up(D, 128)               # minor dim is padded to 128 lanes in VMEM
    chunk = _chunk_rows(D)
    in_row = lane_d * itemsize                # per x pipeline buffer, per row
    out_row = 2 * 8 * 4                       # (1, tb) slab padded to 8 sublanes, 2 bufs
    temps = chunk * lane_d * (2 * itemsize + 4)   # product + f32 copy + w broadcast
    return (2 * in_row + out_row) * tb + temps + 2 * _MIB


def _pick_batch_tile(B, D, dtype, scoped_vmem_bytes, num_cores):
    """Rows per grid step for a memory-bound GEMV, sized by (lane-padded) bytes."""
    itemsize = jnp.dtype(dtype).itemsize
    lane_d = _round_up(D, 128)
    in_row = lane_d * itemsize
    out_row = 2 * 8 * 4
    chunk = _chunk_rows(D)
    fixed = chunk * lane_d * (2 * itemsize + 4) + 3 * _MIB   # temps + slack
    usable = max(scoped_vmem_bytes - fixed, 0)
    tb = max(usable // (2 * in_row + out_row), 128)
    # Never tile past the (lane-rounded) batch.
    tb = min(tb, _round_up(B, 128))
    # 2-TC chips (v7x): give each TensorCore >= 2 grid steps so per-core DMAs pipeline.
    if num_cores >= 2 and B > 2 * num_cores * 128:
        tb = min(tb, _round_up(pl.cdiv(B, 2 * num_cores), 128))
    # Layout: lane-dense output slab; whole inner chunks.
    if tb >= chunk:
        tb = _round_down(tb, chunk)
    else:
        tb = max(128, _round_down(tb, 128))
    return tb


def _loglinear_kernel(x_ref, w_ref, b_ref, o_ref):
    # x_ref: (tb, D)  VMEM input tile (ragged tail rows may be garbage -> masked out)
    # w_ref: (1, D)   VMEM weight row
    # b_ref: (1, 1)   SMEM f32 scalar bias
    # o_ref: (1, tb)  VMEM lane-dense output slab
    tb, d = x_ref.shape
    chunk = min(_chunk_rows(d), tb)
    n_chunks = tb // chunk                    # wrapper guarantees tb % chunk == 0

    w = w_ref[...]                            # (1, D), input dtype
    bias = b_ref[0, 0]                        # f32 scalar

    if n_chunks == 1:
        # Small tile: single VPU multiply + lane reduce, f32 accumulation.
        y = jnp.sum((x_ref[...] * w).astype(jnp.float32), axis=1) + bias
        o_ref[...] = y[None, :].astype(o_ref.dtype)
    else:
        def body(c, carry):
            off = pl.multiple_of(c * chunk, chunk)
            xc = x_ref[pl.ds(off, chunk), :]                          # (chunk, D)
            y = jnp.sum((xc * w).astype(jnp.float32), axis=1) + bias  # (chunk,) f32
            o_ref[:, pl.ds(off, chunk)] = y[None, :].astype(o_ref.dtype)
            return carry

        jax.lax.fori_loop(0, n_chunks, body, 0)


def loglinear_forward(x, weight, bias, *, batch_tile=None, min_pallas_batch=0):
    """y = x @ weight.T + bias   (PyTorch nn.Linear(D, 1) forward).

    x: (B, D); weight: (1, D); bias: (1,).  Returns (B, 1) in x.dtype.
    """
    B, D = x.shape
    assert weight.shape == (1, D)
    assert bias.shape == (1,)

    # Optional tiny-batch escape hatch (kernel launch overhead dominates very small B).
    # Default 0 => always use the Pallas kernel.
    if B <= min_pallas_batch:
        return (x @ weight.T + bias).astype(x.dtype)

    scoped_vmem, vmem_cap, num_cores = _tpu_generation()

    if batch_tile is None:
        tb = _pick_batch_tile(B, D, x.dtype, scoped_vmem, num_cores)
    else:
        chunk = _chunk_rows(D)
        tb = max(128, _round_down(int(batch_tile), 128))
        if tb >= chunk:
            tb = _round_down(tb, chunk)
    n_tiles = pl.cdiv(B, tb)          # ragged tail handled by Pallas boundary blocks

    itemsize = jnp.dtype(x.dtype).itemsize
    need = _vmem_need_bytes(tb, D, x.dtype)
    cp_kwargs = dict(dimension_semantics=("parallel",))
    if need > scoped_vmem:
        # Only raise the scoped-VMEM limit when the minimum-size tiles do not fit
        # (very large embedding_dim); capped per generation (v7x: 64 MiB physical).
        cp_kwargs["vmem_limit_bytes"] = int(min(need, vmem_cap))

    w = weight.astype(x.dtype)
    bias_smem = bias.reshape(1, 1).astype(jnp.float32)

    cost = pl.CostEstimate(
        flops=2 * B * D,
        transcendentals=0,
        bytes_accessed=B * D * itemsize + D * itemsize + B * itemsize,
    )

    out = pl.pallas_call(
        _loglinear_kernel,
        out_shape=jax.ShapeDtypeStruct((1, B), x.dtype),
        grid_spec=pltpu.PrefetchScalarGridSpec(
            num_scalar_prefetch=0,
            grid=(n_tiles,),
            in_specs=[
                pl.BlockSpec((tb, D), lambda i: (i, 0)),             # x tile
                pl.BlockSpec((1, D), lambda i: (0, 0)),              # weight row
                pl.BlockSpec(memory_space=pltpu.MemorySpace.SMEM),   # scalar bias
            ],
            out_specs=pl.BlockSpec((1, tb), lambda i: (0, i)),       # lane-dense slab
        ),
        compiler_params=pltpu.CompilerParams(**cp_kwargs),
        cost_estimate=cost,
    )(x, w, bias_smem)

    return out.reshape(B, 1)


if __name__ == "__main__":
    key = jax.random.PRNGKey(0)
    kx, kw, kb = jax.random.split(key, 3)

    # 1) Small shape matching the module: batch=8, embedding_dim=32.
    B, D = 8, 32
    x = jax.random.normal(kx, (B, D), dtype=jnp.float32)
    bound = 1.0 / (D ** 0.5)
    weight = jax.random.uniform(kw, (1, D), dtype=jnp.float32, minval=-bound, maxval=bound)
    bias = jax.random.uniform(kb, (1,), dtype=jnp.float32, minval=-bound, maxval=bound)

    y = jax.block_until_ready(loglinear_forward(x, weight, bias))
    y_ref = x @ weight.T + bias
    assert y.shape == (B, 1)
    assert jnp.allclose(y, y_ref, atol=1e-5, rtol=1e-5)

    # 2) Multi-tile + ragged tail (B not a multiple of the tile), explicit small tile.
    B2 = 300
    x2 = jax.random.normal(kx, (B2, D), dtype=jnp.float32)
    y2 = jax.block_until_ready(loglinear_forward(x2, weight, bias, batch_tile=128))
    y2_ref = x2 @ weight.T + bias
    assert y2.shape == (B2, 1)
    assert jnp.allclose(y2, y2_ref, atol=1e-5, rtol=1e-5)

    # 3) Lane-padded embedding dim (not a multiple of 128), default tile path.
    B3, D3 = 200, 160
    x3 = jax.random.normal(kx, (B3, D3), dtype=jnp.float32)
    bound3 = 1.0 / (D3 ** 0.5)
    w3 = jax.random.uniform(kw, (1, D3), dtype=jnp.float32, minval=-bound3, maxval=bound3)
    b3 = jax.random.uniform(kb, (1,), dtype=jnp.float32, minval=-bound3, maxval=bound3)
    y3 = jax.block_until_ready(loglinear_forward(x3, w3, b3))
    y3_ref = x3 @ w3.T + b3
    assert y3.shape == (B3, 1)
    assert jnp.allclose(y3, y3_ref, atol=1e-5, rtol=1e-5)

    # 4) Exercise the in-kernel chunked reduce (tile > chunk) + ragged tail.
    B4 = 1500
    x4 = jax.random.normal(kx, (B4, D), dtype=jnp.float32)
    y4 = jax.block_until_ready(loglinear_forward(x4, weight, bias, batch_tile=1024))
    y4_ref = x4 @ weight.T + bias
    assert y4.shape == (B4, 1)
    assert jnp.allclose(y4, y4_ref, atol=1e-5, rtol=1e-5)

    print("KERNEL_OK")
</pallas_src>

<mosaic_0001>
module attributes {stable_mosaic.version = 11 : i64} {
  func.func @_loglinear_kernel(%arg0: i32, %arg1: memref<128x32xf32, #tpu.memory_space<vmem>>, %arg2: memref<1x32xf32, #tpu.memory_space<vmem>>, %arg3: memref<1x1xf32, #tpu.memory_space<smem>>, %arg4: memref<1x128xf32, #tpu.memory_space<vmem>>) attributes {dimension_semantics = [#tpu.dimension_semantics<parallel>], iteration_bounds = array<i64: 1>, scalar_prefetch = 0 : i64, scratch_operands = 0 : i64, tpu.core_type = #tpu.core_type<tc>, window_params = [{transform_indices = @transform_0, window_bounds = array<i64: 128, 32>}, {pipeline_mode = #tpu.pipeline_mode<synchronous>, transform_indices = @transform_1, window_bounds = array<i64: 1, 32>}, {transform_indices = @transform_2, window_bounds = array<i64: 1, 1>}, {transform_indices = @transform_3, window_bounds = array<i64: 1, 128>}]} {
    %c0 = arith.constant 0 : index
    %c0_0 = arith.constant 0 : index
    %0 = vector.load %arg2[%c0, %c0_0] : memref<1x32xf32, #tpu.memory_space<vmem>>, vector<1x32xf32>
    %c0_1 = arith.constant 0 : index
    %c0_2 = arith.constant 0 : index
    %1 = memref.load %arg3[%c0_1, %c0_2] : memref<1x1xf32, #tpu.memory_space<smem>>
    %c0_3 = arith.constant 0 : index
    %c0_4 = arith.constant 0 : index
    %2 = vector.load %arg1[%c0_3, %c0_4] : memref<128x32xf32, #tpu.memory_space<vmem>>, vector<128x32xf32>
    %3 = vector.broadcast %0 : vector<1x32xf32> to vector<128x32xf32>
    %4 = arith.mulf %2, %3 : vector<128x32xf32>
    %cst = arith.constant dense<0.000000e+00> : vector<128xf32>
    %5 = vector.multi_reduction <add>, %4, %cst [1] : vector<128x32xf32> to vector<128xf32>
    %6 = vector.broadcast %1 : f32 to vector<128xf32>
    %7 = arith.addf %5, %6 : vector<128xf32>
    %8 = vector.shape_cast %7 : vector<128xf32> to vector<1x128xf32>
    %c0_5 = arith.constant 0 : index
    %c0_6 = arith.constant 0 : index
    %9 = vector.load %arg4[%c0_5, %c0_6] : memref<1x128xf32, #tpu.memory_space<vmem>>, vector<1x128xf32>
    tpu.vector_store %arg4[%c0_5, %c0_6], %8 {strides = array<i32>} : memref<1x128xf32, #tpu.memory_space<vmem>>, vector<1x128xf32>,
    return
  }
  func.func @transform_0(%arg0: i32) -> (i32, i32) {
    %c0_i32 = arith.constant 0 : i32
    %c0_i32_0 = arith.constant 0 : i32
    return %arg0, %c0_i32 : i32, i32
  }
  func.func @transform_1(%arg0: i32) -> (i32, i32) {
    %c0_i32 = arith.constant 0 : i32
    %c0_i32_0 = arith.constant 0 : i32
    %c0_i32_1 = arith.constant 0 : i32
    return %c0_i32, %c0_i32_0 : i32, i32
  }
  func.func @transform_2(%arg0: i32) -> (i32, i32) {
    %c0_i32 = arith.constant 0 : i32
    %c0_i32_0 = arith.constant 0 : i32
    %c0_i32_1 = arith.constant 0 : i32
    return %c0_i32, %c0_i32_0 : i32, i32
  }
  func.func @transform_3(%arg0: i32) -> (i32, i32) {
    %c0_i32 = arith.constant 0 : i32
    %c0_i32_0 = arith.constant 0 : i32
    return %c0_i32, %arg0 : i32, i32
  }
}

</mosaic_0001>

<llo_original>
// kernel: tpu_custom_call.1
$region0: #{tpu_custom_call.1}
  #allocation0 [shape = 'u32[]', space=smem, size = 0x4, offset = 0x4, fixed_abs, tag = 'smem constant byte address 0x4 - core index']
  #allocation1 [shape = 'u32[144,128]{1,0:T(1,128)}', space=vmem, size = 0x12000, scoped, tag = 'internal scratch']
  #allocation2 [shape = 'f32[1,1]{1,0:T(1,128)S(6)}', space=smem, size = 0x200, scoped, tag = 'scoped memory for tpu_custom_call.1']
  %s0 = inlined_call_operand.hbm [shape: f32[8,32], index: 0, kind: input, shape index: {}]
  %s1 = inlined_call_operand.vmem [shape: f32[1,32], index: 1, kind: input, shape index: {}]
  %s2 = inlined_call_operand.<no memory space> [shape: f32[1,1], index: 2, kind: input, shape index: {}]
  %s3 = inlined_call_operand.hbm [shape: f32[1,8], index: 3, kind: output, shape index: {}]
  %s4 = sld [smem:[#allocation0]]
  $region26: #{tpu_custom_call.1} parent=0
    _
  %s6 = ssub.s32 1, %s4
  %s7 = scalar_select 0, %s6, %s4
  %8 = sst [smem:[#allocation2]] %s2
  $region1: #{tpu_custom_call.1} parent=0
    #allocation3 [shape = 'u8[65536]{0}', space=vmem, size = 0x10000, scoped, tag = 'input window, operand 0, single buffered']
    #allocation4 [shape = 's32[1]{0}', space=sflag, size = 0x4, scoped, tag = 'scoped memory for tpu_custom_call.1']
    #allocation5 [shape = 's32[1]{0}', space=sflag, size = 0x4, scoped, tag = 'scoped memory for tpu_custom_call.1']
    #allocation6 [shape = 'u8[512]{0}', space=vmem, size = 0x400, scoped, tag = 'output window, operand 0, single buffered']
    %9 = vsyncpa [#allocation4], 0
    %10 = vsyncpa [#allocation5], 0
    // Predicated region
    $region2: #{tpu_custom_call.1} parent=1 // pred_check
      _
    $region3: #{tpu_custom_call.1} parent=1 // pred_check_branch
      %12 = sbr.rel (0) target = $region5
    $region4: #{tpu_custom_call.1} parent=1 // pred_region
      %s14 = ssub.s32 2048, 128
      %15 = vsyncadd [#allocation4], %s14
      %s16 = sshll.u32 [#allocation3], 4
      %s17 = int_to_ptr.vmem [resolvable:$true] %s16
      %22 = dma.hbm_to_vmem [thread:$0]  %s0, 128, %s17, [#allocation4], 128, 128, 8
    $region5: #{tpu_custom_call.1} parent=1 // pred_fallthru
      _
    // Predicated region
    $region6: #{tpu_custom_call.1} parent=1 // pred_check
      _
    $region7: #{tpu_custom_call.1} parent=1 // pred_check_branch
      %24 = sbr.rel (0) target = $region9
    $region8: #{tpu_custom_call.1} parent=1 // pred_region
      _
    $region9: #{tpu_custom_call.1} parent=1 // pred_fallthru
      _
    // Predicated region
    $region10: #{tpu_custom_call.1} parent=1 // pred_check
      _
    $region11: #{tpu_custom_call.1} parent=1 // pred_check_branch
      %26 = sbr.rel (0) target = $region13
    $region12: #{tpu_custom_call.1} parent=1 // pred_region
      _
    $region13: #{tpu_custom_call.1} parent=1 // pred_fallthru
      _
    // Predicated region
    $region14: #{tpu_custom_call.1} parent=1 // pred_check
      _
    $region15: #{tpu_custom_call.1} parent=1 // pred_check_branch
      %28 = sbr.rel (0) target = $region17
    $region16: #{tpu_custom_call.1} parent=1 // pred_region
      %29 = dma.done [#allocation4], 2048
    $region17: #{tpu_custom_call.1} parent=1 // pred_fallthru
      _
    %v30 = vld [vmem:[%s1] sm:$0x1]
    %s31 = sld [smem:[#allocation2]]
    %v32 = vld [vmem:[#allocation3] sm:$0xff]
    %v33 = vld [vmem:[#allocation3 + $0x8] sm:$0xff]
    %v34 = vld [vmem:[#allocation3 + $0x10] sm:$0xff]
    %v35 = vld [vmem:[#allocation3 + $0x18] sm:$0xff]
    %v36 = vld [vmem:[#allocation3 + $0x20] sm:$0xff]
    %v37 = vld [vmem:[#allocation3 + $0x28] sm:$0xff]
    %v38 = vld [vmem:[#allocation3 + $0x30] sm:$0xff]
    %v39 = vld [vmem:[#allocation3 + $0x38] sm:$0xff]
    %v40 = vld [vmem:[#allocation3 + $0x40] sm:$0xff]
    %v41 = vld [vmem:[#allocation3 + $0x48] sm:$0xff]
    %v42 = vld [vmem:[#allocation3 + $0x50] sm:$0xff]
    %v43 = vld [vmem:[#allocation3 + $0x58] sm:$0xff]
    %v44 = vld [vmem:[#allocation3 + $0x60] sm:$0xff]
    %v45 = vld [vmem:[#allocation3 + $0x68] sm:$0xff]
    %v46 = vld [vmem:[#allocation3 + $0x70] sm:$0xff]
    %v47 = vld [vmem:[#allocation3 + $0x78] sm:$0xff]
    %v49 = vlaneseq
    %v50 = vshrl.u32 %v49, 7
    %v51 = vsub.s32 0, %v50
    %v52 = vrot.slane %v30, %v51
    %v54 = vmul.f32 %v32, %v52
    %v55 = vmul.f32 %v33, %v52
    %v56 = vmul.f32 %v34, %v52
    %v57 = vmul.f32 %v35, %v52
    %v58 = vmul.f32 %v36, %v52
    %v59 = vmul.f32 %v37, %v52
    %v60 = vmul.f32 %v38, %v52
    %v61 = vmul.f32 %v39, %v52
    %v62 = vmul.f32 %v40, %v52
    %v63 = vmul.f32 %v41, %v52
    %v64 = vmul.f32 %v42, %v52
    %v65 = vmul.f32 %v43, %v52
    %v66 = vmul.f32 %v44, %v52
    %v67 = vmul.f32 %v45, %v52
    %v68 = vmul.f32 %v46, %v52
    %v69 = vmul.f32 %v47, %v52
    %vm70 = vcmask 261120
    %v71 = vsel %vm70, %v54, 0.0
    %72 = vadd.xlane.f32.xlu0 %v71
    %v73 = vpop.xlane.xlu0 %72
    %v74 = vsel %vm70, %v55, 0.0
    %75 = vadd.xlane.f32.xlu0 %v74
    %v76 = vpop.xlane.xlu0 %75
    %v77 = vsel %vm70, %v56, 0.0
    %78 = vadd.xlane.f32.xlu0 %v77
    %v79 = vpop.xlane.xlu0 %78
    %v80 = vsel %vm70, %v57, 0.0
    %81 = vadd.xlane.f32.xlu0 %v80
    %v82 = vpop.xlane.xlu0 %81
    %v83 = vsel %vm70, %v58, 0.0
    %84 = vadd.xlane.f32.xlu0 %v83
    %v85 = vpop.xlane.xlu0 %84
    %v86 = vsel %vm70, %v59, 0.0
    %87 = vadd.xlane.f32.xlu0 %v86
    %v88 = vpop.xlane.xlu0 %87
    %v89 = vsel %vm70, %v60, 0.0
    %90 = vadd.xlane.f32.xlu0 %v89
    %v91 = vpop.xlane.xlu0 %90
    %v92 = vsel %vm70, %v61, 0.0
    %93 = vadd.xlane.f32.xlu0 %v92
    %v94 = vpop.xlane.xlu0 %93
    %v95 = vsel %vm70, %v62, 0.0
    %96 = vadd.xlane.f32.xlu0 %v95
    %v97 = vpop.xlane.xlu0 %96
    %v98 = vsel %vm70, %v63, 0.0
    %99 = vadd.xlane.f32.xlu0 %v98
    %v100 = vpop.xlane.xlu0 %99
    %v101 = vsel %vm70, %v64, 0.0
    %102 = vadd.xlane.f32.xlu0 %v101
    %v103 = vpop.xlane.xlu0 %102
    %v104 = vsel %vm70, %v65, 0.0
    %105 = vadd.xlane.f32.xlu0 %v104
    %v106 = vpop.xlane.xlu0 %105
    %v107 = vsel %vm70, %v66, 0.0
    %108 = vadd.xlane.f32.xlu0 %v107
    %v109 = vpop.xlane.xlu0 %108
    %v110 = vsel %vm70, %v67, 0.0
    %111 = vadd.xlane.f32.xlu0 %v110
    %v112 = vpop.xlane.xlu0 %111
    %v113 = vsel %vm70, %v68, 0.0
    %114 = vadd.xlane.f32.xlu0 %v113
    %v115 = vpop.xlane.xlu0 %114
    %v116 = vsel %vm70, %v69, 0.0
    %117 = vadd.xlane.f32.xlu0 %v116
    %v118 = vpop.xlane.xlu0 %117
    %v119 = vstv %s31
    %v120 = vadd.f32 %v73, %v119
    %v121 = vadd.f32 %v76, %v119
    %v122 = vadd.f32 %v79, %v119
    %v123 = vadd.f32 %v82, %v119
    %v124 = vadd.f32 %v85, %v119
    %v125 = vadd.f32 %v88, %v119
    %v126 = vadd.f32 %v91, %v119
    %v127 = vadd.f32 %v94, %v119
    %v128 = vadd.f32 %v97, %v119
    %v129 = vadd.f32 %v100, %v119
    %v130 = vadd.f32 %v103, %v119
    %v131 = vadd.f32 %v106, %v119
    %v132 = vadd.f32 %v109, %v119
    %v133 = vadd.f32 %v112, %v119
    %v134 = vadd.f32 %v115, %v119
    %v135 = vadd.f32 %v118, %v119
    %v152 = vlaneseq
    %v153 = vand.u32 %v152, 127
    %v154 = vlaneseq
    %v155 = vshrl.u32 %v154, 7
    %v156 = vsub.s32 %v153, %v155
    %v157 = vrot.slane %v120, %v156
    %v158 = vadd.s32 %v153, 4294967288
    %v159 = vlaneseq
    %v160 = vshrl.u32 %v159, 7
    %v161 = vsub.s32 %v158, %v160
    %v162 = vrot.slane %v121, %v161
    %vm163 = vcmask 130112
    %v164 = vsel %vm163, %v162, %v157
    %v165 = vadd.s32 %v153, 4294967280
    %v166 = vlaneseq
    %v167 = vshrl.u32 %v166, 7
    %v168 = vsub.s32 %v165, %v167
    %v169 = vrot.slane %v122, %v168
    %vm170 = vcmask 195712
    %v171 = vsel %vm170, %v169, %v164
    %v172 = vadd.s32 %v153, 4294967272
    %v173 = vlaneseq
    %v174 = vshrl.u32 %v173, 7
    %v175 = vsub.s32 %v172, %v174
    %v176 = vrot.slane %v123, %v175
    %vm177 = vcmask 261312
    %v178 = vsel %vm177, %v176, %v171
    %v179 = vadd.s32 %v153, 4294967264
    %v180 = vlaneseq
    %v181 = vshrl.u32 %v180, 7
    %v182 = vsub.s32 %v179, %v181
    %v183 = vrot.slane %v124, %v182
    %vm184 = vcmask 326912
    %v185 = vsel %vm184, %v183, %v178
    %v186 = vadd.s32 %v153, 4294967256
    %v187 = vlaneseq
    %v188 = vshrl.u32 %v187, 7
    %v189 = vsub.s32 %v186, %v188
    %v190 = vrot.slane %v125, %v189
    %vm191 = vcmask 392512
    %v192 = vsel %vm191, %v190, %v185
    %v193 = vadd.s32 %v153, 4294967248
    %v194 = vlaneseq
    %v195 = vshrl.u32 %v194, 7
    %v196 = vsub.s32 %v193, %v195
    %v197 = vrot.slane %v126, %v196
    %vm198 = vcmask 458112
    %v199 = vsel %vm198, %v197, %v192
    %v200 = vadd.s32 %v153, 4294967240
    %v201 = vlaneseq
    %v202 = vshrl.u32 %v201, 7
    %v203 = vsub.s32 %v200, %v202
    %v204 = vrot.slane %v127, %v203
    %vm205 = vcmask 523712
    %v206 = vsel %vm205, %v204, %v199
    %v207 = vadd.s32 %v153, 4294967232
    %v208 = vlaneseq
    %v209 = vshrl.u32 %v208, 7
    %v210 = vsub.s32 %v207, %v209
    %v211 = vrot.slane %v128, %v210
    %vm212 = vcmask 589312
    %v213 = vsel %vm212, %v211, %v206
    %v214 = vadd.s32 %v153, 4294967224
    %v215 = vlaneseq
    %v216 = vshrl.u32 %v215, 7
    %v217 = vsub.s32 %v214, %v216
    %v218 = vrot.slane %v129, %v217
    %vm219 = vcmask 654912
    %v220 = vsel %vm219, %v218, %v213
    %v221 = vadd.s32 %v153, 4294967216
    %v222 = vlaneseq
    %v223 = vshrl.u32 %v222, 7
    %v224 = vsub.s32 %v221, %v223
    %v225 = vrot.slane %v130, %v224
    %vm226 = vcmask 720512
    %v227 = vsel %vm226, %v225, %v220
    %v228 = vadd.s32 %v153, 4294967208
    %v229 = vlaneseq
    %v230 = vshrl.u32 %v229, 7
    %v231 = vsub.s32 %v228, %v230
    %v232 = vrot.slane %v131, %v231
    %vm233 = vcmask 786112
    %v234 = vsel %vm233, %v232, %v227
    %v235 = vadd.s32 %v153, 4294967200
    %v236 = vlaneseq
    %v237 = vshrl.u32 %v236, 7
    %v238 = vsub.s32 %v235, %v237
    %v239 = vrot.slane %v132, %v238
    %vm240 = vcmask 851712
    %v241 = vsel %vm240, %v239, %v234
    %v242 = vadd.s32 %v153, 4294967192
    %v243 = vlaneseq
    %v244 = vshrl.u32 %v243, 7
    %v245 = vsub.s32 %v242, %v244
    %v246 = vrot.slane %v133, %v245
    %vm247 = vcmask 917312
    %v248 = vsel %vm247, %v246, %v241
    %v249 = vadd.s32 %v153, 4294967184
    %v250 = vlaneseq
    %v251 = vshrl.u32 %v250, 7
    %v252 = vsub.s32 %v249, %v251
    %v253 = vrot.slane %v134, %v252
    %vm254 = vcmask 982912
    %v255 = vsel %vm254, %v253, %v248
    %v256 = vadd.s32 %v153, 4294967176
    %v257 = vlaneseq
    %v258 = vshrl.u32 %v257, 7
    %v259 = vsub.s32 %v256, %v258
    %v260 = vrot.slane %v135, %v259
    %vm261 = vcmask 1048512
    %v262 = vsel %vm261, %v260, %v255
    %264 = vst [vmem:[#allocation6] sm:$0x1] %v262
    // Predicated region
    $region18: #{tpu_custom_call.1} parent=1 // pred_check
      _
    $region19: #{tpu_custom_call.1} parent=1 // pred_check_branch
      %266 = sbr.rel (0) target = $region21
    $region20: #{tpu_custom_call.1} parent=1 // pred_region
      %s268 = ssub.s32 16, 16
      %269 = vsyncadd [#allocation5], %s268
      %s271 = sshll.u32 [#allocation6], 4
      %s272 = int_to_ptr.vmem [resolvable:$true] %s271
      %274 = dma.vmem_to_hbm [thread:$0]  %s272, 16, %s3, [#allocation5]
    $region21: #{tpu_custom_call.1} parent=1 // pred_fallthru
      _
    // Predicated region
    $region22: #{tpu_custom_call.1} parent=1 // pred_check
      _
    $region23: #{tpu_custom_call.1} parent=1 // pred_check_branch
      %276 = sbr.rel (0) target = $region25
    $region24: #{tpu_custom_call.1} parent=1 // pred_region
      %277 = dma.done [#allocation5], 16
    $region25: #{tpu_custom_call.1} parent=1 // pred_fallthru
      _
    %278 = vsyncpa [#allocation4], 1
    %279 = vsyncpa [#allocation5], 1

</llo_original>
